<compile_context>
chip_gen: v6e
topology: v6e:2x2x1
jax: 0.10.0
libtpu: 0.0.40
codegen_flags: <defaults>
</compile_context>

<pallas_src>
import functools

import jax
import jax.numpy as jnp
from jax.experimental import pallas as pl
from jax.experimental.pallas import tpu as pltpu


_DEFAULT_VMEM_LIMIT = 48 << 20  # safe on v7x (64 MiB physical per TensorCore)


def _vmem_limit_bytes():
    """~75% of this chip's per-core VMEM (fallback: 48 MiB)."""
    try:
        cap = int(pltpu.get_tpu_info().vmem_capacity_bytes)
        return (cap * 3) // 4
    except Exception:
        return _DEFAULT_VMEM_LIMIT


def _choose_tiles(n, l, itemsize, vmem_limit):
    """Pick (TM rows, TL cols) per tile from a dtype/intermediate-aware budget."""
    # Per-element VMEM bytes: 2 inputs x 2 pipeline buffers (native dtype)
    # + ~5 f32 temporaries (x/y casts, ex, ey, product) materialized per chunk.
    per_elem = 4 * itemsize + 5 * 4
    # Per-row fixed cost: 5 (TM, 1) f32 accumulators pad to 128 lanes each.
    per_row_fixed = 5 * 128 * 4
    usable = max(1 << 20, vmem_limit - (2 << 20))  # small reserve (out blocks, sems)

    # --- L chunking: keep at least 8 rows per tile within the budget.
    max_tl = (usable - 8 * per_row_fixed) // (8 * per_elem)
    if l <= max(128, max_tl):
        tl = l
    else:
        tl = max(128, (max_tl // 128) * 128)

    # --- Rows per tile from the remaining budget.
    tm = usable // (tl * per_elem + per_row_fixed)
    tm = int(min(tm, 2048, n))
    if tm < n:
        tm = max(8, (tm // 8) * 8)
    tm = max(1, min(tm, n))

    # --- v7x megacore: ensure >= 2 row tiles when N is big enough to split.
    if tm >= n and n >= 512:
        tm = max(256, (((n + 1) // 2 + 7) // 8) * 8)

    return tm, min(tl, l)


def _multi_ce_kernel(x_ref, y_ref, out_ref,
                     mx_ref, sx_ref, my_ref, sy_ref, a_ref,
                     *, n_total, l_total, block_l, mask_rows, mask_cols):
    """One (row tile, L chunk) step of the online-softmax fused loss.

    Accumulators (all (TM, 1) f32 scratch, re-initialized at chunk 0):
      mx, sx : running max / scaled exp-sum of x
      my, sy : running max / scaled exp-sum of y
      a      : running sum_j exp(x_j - mx) * (y_j - my)
    Finalize (last chunk): row_term = a / sx - log(sy); masked rows -> 0;
    write the tile's scalar partial sum as a lane-dense (1, 8, 128) block.
    """
    i = pl.program_id(0)           # row tile
    j = pl.program_id(1)           # L chunk
    n_l = pl.num_programs(1)

    x = x_ref[...].astype(jnp.float32)
    y = y_ref[...].astype(jnp.float32)
    tm, tl = x.shape

    if mask_cols:
        col_ids = j * block_l + jax.lax.broadcasted_iota(jnp.int32, (1, tl), 1)
        col_valid = col_ids < l_total
        neg_inf = jnp.float32(-jnp.inf)
        x = jnp.where(col_valid, x, neg_inf)   # exp -> 0, max unaffected
        y = jnp.where(col_valid, y, neg_inf)

    @pl.when(j == 0)
    def _():
        mx_ref[...] = jnp.full(mx_ref.shape, -jnp.inf, jnp.float32)
        my_ref[...] = jnp.full(my_ref.shape, -jnp.inf, jnp.float32)
        sx_ref[...] = jnp.zeros(sx_ref.shape, jnp.float32)
        sy_ref[...] = jnp.zeros(sy_ref.shape, jnp.float32)
        a_ref[...] = jnp.zeros(a_ref.shape, jnp.float32)

    mx_old = mx_ref[...]
    my_old = my_ref[...]
    sx_old = sx_ref[...]
    sy_old = sy_ref[...]
    a_old = a_ref[...]

    mx_new = jnp.maximum(mx_old, jnp.max(x, axis=1, keepdims=True))
    my_new = jnp.maximum(my_old, jnp.max(y, axis=1, keepdims=True))

    ex = jnp.exp(x - mx_new)                                   # (TM, TL)
    ey = jnp.exp(y - my_new)                                   # (TM, TL)
    y_shift = y - my_new                                       # (TM, TL)

    alpha_x = jnp.exp(mx_old - mx_new)                         # (TM, 1)
    alpha_y = jnp.exp(my_old - my_new)                         # (TM, 1)

    # Rescale old numerator to the new (mx, my); guard the first-chunk case
    # (sx_old == 0, my_old == -inf) so no -inf * 0 NaN is produced.
    corr = jnp.where(sx_old > 0, (my_old - my_new) * sx_old, 0.0)
    contrib = ex * y_shift
    if mask_cols:
        contrib = jnp.where(col_valid, contrib, 0.0)

    sx_ref[...] = sx_old * alpha_x + jnp.sum(ex, axis=1, keepdims=True)
    sy_ref[...] = sy_old * alpha_y + jnp.sum(ey, axis=1, keepdims=True)
    a_ref[...] = alpha_x * (a_old + corr) + jnp.sum(contrib, axis=1, keepdims=True)
    mx_ref[...] = mx_new
    my_ref[...] = my_new

    @pl.when(j == n_l - 1)
    def _():
        # Per-row dot(softmax(x), log_softmax(y)); exact divide (no approx).
        row_term = a_ref[...] / sx_ref[...] - jnp.log(sy_ref[...])
        if mask_rows:
            row_ids = i * tm + jax.lax.broadcasted_iota(jnp.int32, (tm, 1), 0)
            row_term = jnp.where(row_ids < n_total, row_term, 0.0)
        out_ref[...] = jnp.full((1, 8, 128), jnp.sum(row_term), dtype=jnp.float32)


def _multi_ce_xla(x, y):
    """Fused XLA reference (also the small-L fast path)."""
    xf = x.astype(jnp.float32)
    yf = y.astype(jnp.float32)
    sx = jax.nn.softmax(xf, axis=1)
    log_sy = jax.nn.log_softmax(yf, axis=1)
    return -jnp.sum(sx * log_sy) / jnp.float32(x.shape[0])


def multi_cross_entropy_loss(x, y, *, tm=None, tl=None, small_l_fallback=True):
    """Pallas TPU implementation of MultiCrossEntropyLoss.forward(x, y).

    x, y: (N, L) logits (any float dtype).  Softmax over dim=1.  Returns the
    scalar f32 loss = -(1/N) * sum_i dot(softmax(x)_i, log(softmax(y)_i)).
    """
    assert x.shape == y.shape and x.ndim == 2
    n, l = x.shape

    # At L < 128 the kernel uses <=L/128 of each lane and is dominated by
    # launch/grid overhead; route tiny-L shapes to the fused XLA path.
    if small_l_fallback and l < 128 and tm is None and tl is None:
        return _multi_ce_xla(x, y)

    vmem_limit = _vmem_limit_bytes()
    itemsize = jnp.dtype(x.dtype).itemsize
    auto_tm, auto_tl = _choose_tiles(n, l, itemsize, vmem_limit)
    tm = auto_tm if tm is None else tm
    tl = auto_tl if tl is None else tl
    assert tm == n or (tm % 8 == 0 and tm <= n), (tm, n)
    assert tl == l or (tl % 128 == 0 and tl <= l), (tl, l)

    nt_m = pl.cdiv(n, tm)
    nt_l = pl.cdiv(l, tl)

    kernel = functools.partial(
        _multi_ce_kernel,
        n_total=n,
        l_total=l,
        block_l=tl,
        mask_rows=(n % tm != 0),
        mask_cols=(l % tl != 0),
    )

    partials = pl.pallas_call(
        kernel,
        out_shape=jax.ShapeDtypeStruct((nt_m, 8, 128), jnp.float32),
        grid_spec=pltpu.PrefetchScalarGridSpec(
            num_scalar_prefetch=0,
            grid=(nt_m, nt_l),
            in_specs=[
                pl.BlockSpec((tm, tl), lambda i, j: (i, j)),
                pl.BlockSpec((tm, tl), lambda i, j: (i, j)),
            ],
            out_specs=pl.BlockSpec((1, 8, 128), lambda i, j: (i, 0, 0)),
            scratch_shapes=[pltpu.VMEM((tm, 1), jnp.float32)] * 5,
        ),
        compiler_params=pltpu.CompilerParams(
            dimension_semantics=("parallel", "arbitrary"),
            vmem_limit_bytes=vmem_limit,
        ),
    )(x, y)  # native dtype in; cast to f32 happens per-tile inside the kernel

    # Tiny final reduction over per-tile partials + 1/N normalization.
    return -jnp.sum(partials[:, 0, 0]) / jnp.float32(n)


if __name__ == "__main__":
    key = jax.random.PRNGKey(0)
    k1, k2, k3, k4 = jax.random.split(key, 4)

    # CIFAR-10-like shape from the module: batch=8 rows of 10-class logits.
    # Force the Pallas path (default dispatch would use the XLA fast path at L=10).
    N, L = 8, 10
    x = jax.random.normal(k1, (N, L), dtype=jnp.float32)
    y = jax.random.normal(k2, (N, L), dtype=jnp.float32)
    loss = jax.block_until_ready(
        multi_cross_entropy_loss(x, y, small_l_fallback=False))
    ref = jax.block_until_ready(_multi_ce_xla(x, y))
    assert jnp.allclose(loss, ref, rtol=1e-5, atol=1e-5), (loss, ref)

    # Exercise ragged row tiles + the L-chunked online-softmax path (still small).
    N2, L2 = 100, 300
    x2 = jax.random.normal(k3, (N2, L2), dtype=jnp.float32)
    y2 = jax.random.normal(k4, (N2, L2), dtype=jnp.float32)
    loss2 = jax.block_until_ready(
        multi_cross_entropy_loss(x2, y2, tm=32, tl=128, small_l_fallback=False))
    ref2 = jax.block_until_ready(_multi_ce_xla(x2, y2))
    assert jnp.allclose(loss2, ref2, rtol=1e-5, atol=1e-5), (loss2, ref2)

    print("KERNEL_OK")
</pallas_src>

<mosaic_0001>
module attributes {stable_mosaic.version = 11 : i64} {
  func.func @_multi_ce_kernel(%arg0: i32, %arg1: i32, %arg2: memref<8x10xf32, #tpu.memory_space<vmem>>, %arg3: memref<8x10xf32, #tpu.memory_space<vmem>>, %arg4: memref<1x8x128xf32, #tpu.memory_space<vmem>>, %arg5: memref<8x1xf32, #tpu.memory_space<vmem>>, %arg6: memref<8x1xf32, #tpu.memory_space<vmem>>, %arg7: memref<8x1xf32, #tpu.memory_space<vmem>>, %arg8: memref<8x1xf32, #tpu.memory_space<vmem>>, %arg9: memref<8x1xf32, #tpu.memory_space<vmem>>) attributes {dimension_semantics = [#tpu.dimension_semantics<parallel>, #tpu.dimension_semantics<arbitrary>], iteration_bounds = array<i64: 1, 1>, scalar_prefetch = 0 : i64, scratch_operands = 5 : i64, tpu.core_type = #tpu.core_type<tc>, window_params = [{transform_indices = @transform_0, window_bounds = array<i64: 8, 10>}, {transform_indices = @transform_1, window_bounds = array<i64: 8, 10>}, {transform_indices = @transform_2, window_bounds = array<i64: 1, 8, 128>}]} {
    %c0 = arith.constant 0 : index
    %c0_0 = arith.constant 0 : index
    %0 = vector.load %arg2[%c0, %c0_0] : memref<8x10xf32, #tpu.memory_space<vmem>>, vector<8x10xf32>
    %c0_1 = arith.constant 0 : index
    %c0_2 = arith.constant 0 : index
    %1 = vector.load %arg3[%c0_1, %c0_2] : memref<8x10xf32, #tpu.memory_space<vmem>>, vector<8x10xf32>
    %c0_i32 = arith.constant 0 : i32
    %2 = arith.cmpi eq, %arg1, %c0_i32 : i32
    %3 = arith.extui %2 : i1 to i32
    %c0_i32_3 = arith.constant 0 : i32
    %4 = arith.cmpi ne, %3, %c0_i32_3 : i32
    scf.if %4 {
      %cst_32 = arith.constant 0xFF800000 : f32
      %56 = vector.broadcast %cst_32 : f32 to vector<8x1xf32>
      %c0_33 = arith.constant 0 : index
      %c0_34 = arith.constant 0 : index
      %57 = vector.load %arg5[%c0_33, %c0_34] : memref<8x1xf32, #tpu.memory_space<vmem>>, vector<8x1xf32>
      tpu.vector_store %arg5[%c0_33, %c0_34], %56 {strides = array<i32>} : memref<8x1xf32, #tpu.memory_space<vmem>>, vector<8x1xf32>,
      %cst_35 = arith.constant 0xFF800000 : f32
      %58 = vector.broadcast %cst_35 : f32 to vector<8x1xf32>
      %c0_36 = arith.constant 0 : index
      %c0_37 = arith.constant 0 : index
      %59 = vector.load %arg7[%c0_36, %c0_37] : memref<8x1xf32, #tpu.memory_space<vmem>>, vector<8x1xf32>
      tpu.vector_store %arg7[%c0_36, %c0_37], %58 {strides = array<i32>} : memref<8x1xf32, #tpu.memory_space<vmem>>, vector<8x1xf32>,
      %cst_38 = arith.constant 0.000000e+00 : f32
      %60 = vector.broadcast %cst_38 : f32 to vector<8x1xf32>
      %c0_39 = arith.constant 0 : index
      %c0_40 = arith.constant 0 : index
      %61 = vector.load %arg6[%c0_39, %c0_40] : memref<8x1xf32, #tpu.memory_space<vmem>>, vector<8x1xf32>
      tpu.vector_store %arg6[%c0_39, %c0_40], %60 {strides = array<i32>} : memref<8x1xf32, #tpu.memory_space<vmem>>, vector<8x1xf32>,
      %cst_41 = arith.constant 0.000000e+00 : f32
      %62 = vector.broadcast %cst_41 : f32 to vector<8x1xf32>
      %c0_42 = arith.constant 0 : index
      %c0_43 = arith.constant 0 : index
      %63 = vector.load %arg8[%c0_42, %c0_43] : memref<8x1xf32, #tpu.memory_space<vmem>>, vector<8x1xf32>
      tpu.vector_store %arg8[%c0_42, %c0_43], %62 {strides = array<i32>} : memref<8x1xf32, #tpu.memory_space<vmem>>, vector<8x1xf32>,
      %cst_44 = arith.constant 0.000000e+00 : f32
      %64 = vector.broadcast %cst_44 : f32 to vector<8x1xf32>
      %c0_45 = arith.constant 0 : index
      %c0_46 = arith.constant 0 : index
      %65 = vector.load %arg9[%c0_45, %c0_46] : memref<8x1xf32, #tpu.memory_space<vmem>>, vector<8x1xf32>
      tpu.vector_store %arg9[%c0_45, %c0_46], %64 {strides = array<i32>} : memref<8x1xf32, #tpu.memory_space<vmem>>, vector<8x1xf32>,
    } else {
    }
    %c0_4 = arith.constant 0 : index
    %c0_5 = arith.constant 0 : index
    %5 = vector.load %arg5[%c0_4, %c0_5] : memref<8x1xf32, #tpu.memory_space<vmem>>, vector<8x1xf32>
    %c0_6 = arith.constant 0 : index
    %c0_7 = arith.constant 0 : index
    %6 = vector.load %arg7[%c0_6, %c0_7] : memref<8x1xf32, #tpu.memory_space<vmem>>, vector<8x1xf32>
    %c0_8 = arith.constant 0 : index
    %c0_9 = arith.constant 0 : index
    %7 = vector.load %arg6[%c0_8, %c0_9] : memref<8x1xf32, #tpu.memory_space<vmem>>, vector<8x1xf32>
    %c0_10 = arith.constant 0 : index
    %c0_11 = arith.constant 0 : index
    %8 = vector.load %arg8[%c0_10, %c0_11] : memref<8x1xf32, #tpu.memory_space<vmem>>, vector<8x1xf32>
    %c0_12 = arith.constant 0 : index
    %c0_13 = arith.constant 0 : index
    %9 = vector.load %arg9[%c0_12, %c0_13] : memref<8x1xf32, #tpu.memory_space<vmem>>, vector<8x1xf32>
    %cst = arith.constant dense<0xFF800000> : vector<8xf32>
    %10 = vector.multi_reduction <maximumf>, %0, %cst [1] : vector<8x10xf32> to vector<8xf32>
    %11 = vector.shape_cast %10 : vector<8xf32> to vector<8x1xf32>
    %12 = arith.maximumf %5, %11 : vector<8x1xf32>
    %cst_14 = arith.constant dense<0xFF800000> : vector<8xf32>
    %13 = vector.multi_reduction <maximumf>, %1, %cst_14 [1] : vector<8x10xf32> to vector<8xf32>
    %14 = vector.shape_cast %13 : vector<8xf32> to vector<8x1xf32>
    %15 = arith.maximumf %6, %14 : vector<8x1xf32>
    %16 = vector.broadcast %12 : vector<8x1xf32> to vector<8x10xf32>
    %17 = arith.subf %0, %16 : vector<8x10xf32>
    %18 = math.exp %17 : vector<8x10xf32>
    %19 = vector.broadcast %15 : vector<8x1xf32> to vector<8x10xf32>
    %20 = arith.subf %1, %19 : vector<8x10xf32>
    %21 = math.exp %20 : vector<8x10xf32>
    %22 = vector.broadcast %15 : vector<8x1xf32> to vector<8x10xf32>
    %23 = arith.subf %1, %22 : vector<8x10xf32>
    %24 = arith.subf %5, %12 : vector<8x1xf32>
    %25 = math.exp %24 : vector<8x1xf32>
    %26 = arith.subf %6, %15 : vector<8x1xf32>
    %27 = math.exp %26 : vector<8x1xf32>
    %cst_15 = arith.constant 0.000000e+00 : f32
    %28 = vector.broadcast %cst_15 : f32 to vector<8x1xf32>
    %29 = arith.cmpf ogt, %7, %28 : vector<8x1xf32>
    %30 = arith.subf %6, %15 : vector<8x1xf32>
    %31 = arith.mulf %30, %7 : vector<8x1xf32>
    %cst_16 = arith.constant 0.000000e+00 : f32
    %32 = vector.broadcast %cst_16 : f32 to vector<8x1xf32>
    %33 = arith.select %29, %31, %32 : vector<8x1xi1>, vector<8x1xf32>
    %34 = arith.mulf %18, %23 : vector<8x10xf32>
    %35 = arith.mulf %7, %25 : vector<8x1xf32>
    %cst_17 = arith.constant dense<0.000000e+00> : vector<8xf32>
    %36 = vector.multi_reduction <add>, %18, %cst_17 [1] : vector<8x10xf32> to vector<8xf32>
    %37 = vector.shape_cast %36 : vector<8xf32> to vector<8x1xf32>
    %38 = arith.addf %35, %37 : vector<8x1xf32>
    %c0_18 = arith.constant 0 : index
    %c0_19 = arith.constant 0 : index
    %39 = vector.load %arg6[%c0_18, %c0_19] : memref<8x1xf32, #tpu.memory_space<vmem>>, vector<8x1xf32>
    tpu.vector_store %arg6[%c0_18, %c0_19], %38 {strides = array<i32>} : memref<8x1xf32, #tpu.memory_space<vmem>>, vector<8x1xf32>,
    %40 = arith.mulf %8, %27 : vector<8x1xf32>
    %cst_20 = arith.constant dense<0.000000e+00> : vector<8xf32>
    %41 = vector.multi_reduction <add>, %21, %cst_20 [1] : vector<8x10xf32> to vector<8xf32>
    %42 = vector.shape_cast %41 : vector<8xf32> to vector<8x1xf32>
    %43 = arith.addf %40, %42 : vector<8x1xf32>
    %c0_21 = arith.constant 0 : index
    %c0_22 = arith.constant 0 : index
    %44 = vector.load %arg8[%c0_21, %c0_22] : memref<8x1xf32, #tpu.memory_space<vmem>>, vector<8x1xf32>
    tpu.vector_store %arg8[%c0_21, %c0_22], %43 {strides = array<i32>} : memref<8x1xf32, #tpu.memory_space<vmem>>, vector<8x1xf32>,
    %45 = arith.addf %9, %33 : vector<8x1xf32>
    %46 = arith.mulf %25, %45 : vector<8x1xf32>
    %cst_23 = arith.constant dense<0.000000e+00> : vector<8xf32>
    %47 = vector.multi_reduction <add>, %34, %cst_23 [1] : vector<8x10xf32> to vector<8xf32>
    %48 = vector.shape_cast %47 : vector<8xf32> to vector<8x1xf32>
    %49 = arith.addf %46, %48 : vector<8x1xf32>
    %c0_24 = arith.constant 0 : index
    %c0_25 = arith.constant 0 : index
    %50 = vector.load %arg9[%c0_24, %c0_25] : memref<8x1xf32, #tpu.memory_space<vmem>>, vector<8x1xf32>
    tpu.vector_store %arg9[%c0_24, %c0_25], %49 {strides = array<i32>} : memref<8x1xf32, #tpu.memory_space<vmem>>, vector<8x1xf32>,
    %c0_26 = arith.constant 0 : index
    %c0_27 = arith.constant 0 : index
    %51 = vector.load %arg5[%c0_26, %c0_27] : memref<8x1xf32, #tpu.memory_space<vmem>>, vector<8x1xf32>
    tpu.vector_store %arg5[%c0_26, %c0_27], %12 {strides = array<i32>} : memref<8x1xf32, #tpu.memory_space<vmem>>, vector<8x1xf32>,
    %c0_28 = arith.constant 0 : index
    %c0_29 = arith.constant 0 : index
    %52 = vector.load %arg7[%c0_28, %c0_29] : memref<8x1xf32, #tpu.memory_space<vmem>>, vector<8x1xf32>
    tpu.vector_store %arg7[%c0_28, %c0_29], %15 {strides = array<i32>} : memref<8x1xf32, #tpu.memory_space<vmem>>, vector<8x1xf32>,
    %c0_i32_30 = arith.constant 0 : i32
    %53 = arith.cmpi eq, %arg1, %c0_i32_30 : i32
    %54 = arith.extui %53 : i1 to i32
    %c0_i32_31 = arith.constant 0 : i32
    %55 = arith.cmpi ne, %54, %c0_i32_31 : i32
    scf.if %55 {
      %c0_32 = arith.constant 0 : index
      %c0_33 = arith.constant 0 : index
      %56 = vector.load %arg9[%c0_32, %c0_33] : memref<8x1xf32, #tpu.memory_space<vmem>>, vector<8x1xf32>
      %c0_34 = arith.constant 0 : index
      %c0_35 = arith.constant 0 : index
      %57 = vector.load %arg6[%c0_34, %c0_35] : memref<8x1xf32, #tpu.memory_space<vmem>>, vector<8x1xf32>
      %58 = arith.divf %56, %57 : vector<8x1xf32>
      %c0_36 = arith.constant 0 : index
      %c0_37 = arith.constant 0 : index
      %59 = vector.load %arg8[%c0_36, %c0_37] : memref<8x1xf32, #tpu.memory_space<vmem>>, vector<8x1xf32>
      %60 = math.log %59 : vector<8x1xf32>
      %61 = arith.subf %58, %60 : vector<8x1xf32>
      %62 = vector.shape_cast %61 : vector<8x1xf32> to vector<1x8x1xf32>
      %cst_38 = arith.constant dense<0.000000e+00> : vector<1xf32>
      %63 = vector.multi_reduction <add>, %62, %cst_38 [1, 2] : vector<1x8x1xf32> to vector<1xf32>
      %64 = vector.shape_cast %63 : vector<1xf32> to vector<1x1x1xf32>
      %65 = vector.extract %64[0, 0, 0] : f32 from vector<1x1x1xf32>
      %66 = vector.broadcast %65 : f32 to vector<1x8x128xf32>
      %c0_39 = arith.constant 0 : index
      %c0_40 = arith.constant 0 : index
      %c0_41 = arith.constant 0 : index
      %67 = vector.load %arg4[%c0_39, %c0_40, %c0_41] : memref<1x8x128xf32, #tpu.memory_space<vmem>>, vector<1x8x128xf32>
      tpu.vector_store %arg4[%c0_39, %c0_40, %c0_41], %66 {strides = array<i32>} : memref<1x8x128xf32, #tpu.memory_space<vmem>>, vector<1x8x128xf32>,
    } else {
    }
    return
  }
  func.func @transform_0(%arg0: i32, %arg1: i32) -> (i32, i32) {
    %c0_i32 = arith.constant 0 : i32
    return %arg0, %arg1 : i32, i32
  }
  func.func @transform_1(%arg0: i32, %arg1: i32) -> (i32, i32) {
    %c0_i32 = arith.constant 0 : i32
    return %arg0, %arg1 : i32, i32
  }
  func.func @transform_2(%arg0: i32, %arg1: i32) -> (i32, i32, i32) {
    %c0_i32 = arith.constant 0 : i32
    %c0_i32_0 = arith.constant 0 : i32
    %c0_i32_1 = arith.constant 0 : i32
    return %arg0, %c0_i32, %c0_i32_0 : i32, i32, i32
  }
}

</mosaic_0001>

<llo_original>
// kernel: tpu_custom_call.1
$region0: #{tpu_custom_call.1}
  #allocation0 [shape = 'u32[]', space=smem, size = 0x4, offset = 0x4, fixed_abs, tag = 'smem constant byte address 0x4 - core index']
  #allocation1 [shape = 'u32[144,128]{1,0:T(1,128)}', space=vmem, size = 0x12000, scoped, tag = 'internal scratch']
  #allocation2 [shape = 'f32[8,1]{1,0:T(8,128)}', space=vmem, size = 0x1000, scoped, tag = 'scratch operand']
  #allocation3 [shape = 'f32[8,1]{1,0:T(8,128)}', space=vmem, size = 0x1000, scoped, tag = 'scratch operand']
  #allocation4 [shape = 'f32[8,1]{1,0:T(8,128)}', space=vmem, size = 0x1000, scoped, tag = 'scratch operand']
  #allocation5 [shape = 'f32[8,1]{1,0:T(8,128)}', space=vmem, size = 0x1000, scoped, tag = 'scratch operand']
  #allocation6 [shape = 'f32[8,1]{1,0:T(8,128)}', space=vmem, size = 0x1000, scoped, tag = 'scratch operand']
  %s0 = inlined_call_operand.hbm [shape: f32[8,10], index: 0, kind: input, shape index: {}]
  %s1 = inlined_call_operand.hbm [shape: f32[8,10], index: 1, kind: input, shape index: {}]
  %s2 = inlined_call_operand.hbm [shape: f32[1,8,128], index: 2, kind: output, shape index: {}]
  %s3 = sld [smem:[#allocation0]]
  $region34: #{tpu_custom_call.1} parent=0
    _
  %s5 = ssub.s32 1, %s3
  %s6 = scalar_select 0, %s5, %s3
  $region1: #{tpu_custom_call.1} parent=0
    #allocation7 [shape = 'u8[4096]{0}', space=vmem, size = 0x1000, scoped, tag = 'input window, operand 0, single buffered']
    #allocation8 [shape = 's32[1]{0}', space=sflag, size = 0x4, scoped, tag = 'scoped memory for tpu_custom_call.1']
    #allocation9 [shape = 's32[1]{0}', space=sflag, size = 0x4, scoped, tag = 'scoped memory for tpu_custom_call.1']
    #allocation10 [shape = 'u8[4096]{0}', space=vmem, size = 0x1000, scoped, tag = 'input window, operand 1, single buffered']
    #allocation11 [shape = 's32[1]{0}', space=sflag, size = 0x4, scoped, tag = 'scoped memory for tpu_custom_call.1']
    #allocation12 [shape = 'u8[4096]{0}', space=vmem, size = 0x1000, scoped, tag = 'output window, operand 0, single buffered']
    %7 = vsyncpa [#allocation8], 0
    %8 = vsyncpa [#allocation11], 0
    %9 = vsyncpa [#allocation9], 0
    // Predicated region
    $region2: #{tpu_custom_call.1} parent=1 // pred_check
      _
    $region3: #{tpu_custom_call.1} parent=1 // pred_check_branch
      %11 = sbr.rel (0) target = $region5
    $region4: #{tpu_custom_call.1} parent=1 // pred_region
      %s13 = ssub.s32 128, 128
      %14 = vsyncadd [#allocation8], %s13
      %s16 = sshll.u32 [#allocation7], 4
      %s17 = int_to_ptr.vmem [resolvable:$true] %s16
      %19 = dma.hbm_to_vmem [thread:$0]  %s0, 128, %s17, [#allocation8]
    $region5: #{tpu_custom_call.1} parent=1 // pred_fallthru
      _
    // Predicated region
    $region6: #{tpu_custom_call.1} parent=1 // pred_check
      _
    $region7: #{tpu_custom_call.1} parent=1 // pred_check_branch
      %21 = sbr.rel (0) target = $region9
    $region8: #{tpu_custom_call.1} parent=1 // pred_region
      %s23 = ssub.s32 128, 128
      %24 = vsyncadd [#allocation11], %s23
      %s26 = sshll.u32 [#allocation10], 4
      %s27 = int_to_ptr.vmem [resolvable:$true] %s26
      %29 = dma.hbm_to_vmem [thread:$0]  %s1, 128, %s27, [#allocation11]
    $region9: #{tpu_custom_call.1} parent=1 // pred_fallthru
      _
    // Predicated region
    $region10: #{tpu_custom_call.1} parent=1 // pred_check
      _
    $region11: #{tpu_custom_call.1} parent=1 // pred_check_branch
      %31 = sbr.rel (0) target = $region13
    $region12: #{tpu_custom_call.1} parent=1 // pred_region
      %32 = dma.done [#allocation8], 128
    $region13: #{tpu_custom_call.1} parent=1 // pred_fallthru
      _
    // Predicated region
    $region14: #{tpu_custom_call.1} parent=1 // pred_check
      _
    $region15: #{tpu_custom_call.1} parent=1 // pred_check_branch
      %34 = sbr.rel (0) target = $region17
    $region16: #{tpu_custom_call.1} parent=1 // pred_region
      %35 = dma.done [#allocation11], 128
    $region17: #{tpu_custom_call.1} parent=1 // pred_fallthru
      _
    %v36 = vld [vmem:[#allocation7] sm:$0xff]
    %v37 = vld [vmem:[#allocation10] sm:$0xff]
    %p38 = scmp.eq.s32.totalorder 0, 0
    // Predicated region
    $region18: #{tpu_custom_call.1} parent=1 // pred_check
      %p39 = pneg %p38
    $region19: #{tpu_custom_call.1} parent=1 // pred_check_branch
      %41 = sbr.rel (%p39) target = $region21
    $region20: #{tpu_custom_call.1} parent=1 // pred_region
      %vm42 = vcmask 7168
      %43 = vst.msk [vmem:[#allocation2] sm:$0xff] %vm42, -inf
      %44 = vst.msk [vmem:[#allocation4] sm:$0xff] %vm42, -inf
      %45 = vst.msk [vmem:[#allocation3] sm:$0xff] %vm42, 0.0
      %46 = vst.msk [vmem:[#allocation5] sm:$0xff] %vm42, 0.0
      %47 = vst.msk [vmem:[#allocation6] sm:$0xff] %vm42, 0.0
    $region21: #{tpu_custom_call.1} parent=1 // pred_fallthru
      _
    %v48 = vld [vmem:[#allocation2] sm:$0xff]
    %v49 = vld [vmem:[#allocation4] sm:$0xff]
    %v50 = vld [vmem:[#allocation3] sm:$0xff]
    %v51 = vld [vmem:[#allocation5] sm:$0xff]
    %v52 = vld [vmem:[#allocation6] sm:$0xff]
    %vm53 = vcmask 80896
    %v54 = vsel %vm53, %v36, -inf
    %55 = vmax.xlane.f32.xlu0 %v54
    %v56 = vpop.xlane.xlu0 %55
    %v57 = vmax.f32 %v48, %v56
    %v58 = vsel %vm53, %v37, -inf
    %59 = vmax.xlane.f32.xlu0 %v58
    %v60 = vpop.xlane.xlu0 %59
    %v61 = vmax.f32 %v49, %v60
    %63 = vset.pattern.permute.xlu0 0
    %64 = vperm.xlu0 %63, %v57
    %v65 = vpop.permute.xlu0 %64
    %v67 = vsub.f32 %v36, %v65
    %v68 = vmul.f32 %v67, 1.442695
    %v69 = vpow.pop %v68
    %71 = vset.pattern.permute.xlu0 0
    %72 = vperm.xlu0 %71, %v61
    %v73 = vpop.permute.xlu0 %72
    %v75 = vsub.f32 %v37, %v73
    %v76 = vmul.f32 %v75, 1.442695
    %v77 = vpow.pop %v76
    %v78 = vsub.f32 %v48, %v57
    %v79 = vmul.f32 %v78, 1.442695
    %v80 = vpow.pop %v79
    %v81 = vsub.f32 %v49, %v61
    %v82 = vmul.f32 %v81, 1.442695
    %v83 = vpow.pop %v82
    %vm84 = vcmp.gt.f32.partialorder %v50, 0.0
    %v85 = vmul.f32 %v81, %v50
    %v86 = vsel %vm84, %v85, 0.0
    %v87 = vmul.f32 %v69, %v75
    %v88 = vmul.f32 %v50, %v80
    %v89 = vsel %vm53, %v69, 0.0
    %90 = vadd.xlane.f32.xlu0 %v89
    %v91 = vpop.xlane.xlu0 %90
    %v92 = vadd.f32 %v88, %v91
    %vm93 = vcmask 7168
    %94 = vst.msk [vmem:[#allocation3] sm:$0xff] %vm93, %v92
    %v95 = vmul.f32 %v51, %v83
    %v96 = vsel %vm53, %v77, 0.0
    %97 = vadd.xlane.f32.xlu0 %v96
    %v98 = vpop.xlane.xlu0 %97
    %v99 = vadd.f32 %v95, %v98
    %100 = vst.msk [vmem:[#allocation5] sm:$0xff] %vm93, %v99
    %v101 = vadd.f32 %v52, %v86
    %v102 = vmul.f32 %v80, %v101
    %v103 = vsel %vm53, %v87, 0.0
    %104 = vadd.xlane.f32.xlu0 %v103
    %v105 = vpop.xlane.xlu0 %104
    %v106 = vadd.f32 %v102, %v105
    %107 = vst.msk [vmem:[#allocation6] sm:$0xff] %vm93, %v106
    %108 = vst.msk [vmem:[#allocation2] sm:$0xff] %vm93, %v57
    %109 = vst.msk [vmem:[#allocation4] sm:$0xff] %vm93, %v61
    // Predicated region
    $region22: #{tpu_custom_call.1} parent=1 // pred_check
      %p110 = pneg %p38
    $region23: #{tpu_custom_call.1} parent=1 // pred_check_branch
      %112 = sbr.rel (%p110) target = $region25
    $region24: #{tpu_custom_call.1} parent=1 // pred_region
      %v113 = vld [vmem:[#allocation6] sm:$0xff]
      %v114 = vld [vmem:[#allocation3] sm:$0xff]
      %v115 = vrcp.pop %v114
      %v116 = vmul.f32 %v113, %v115
      %v117 = vld [vmem:[#allocation5] sm:$0xff]
      %v118 = vlog2.pop %v117
      %v119 = vmul.f32 %v118, 0.6931472
      %v120 = vsub.f32 %v116, %v119
      %v121 = vsel %vm93, %v120, 0.0
      %122 = vadd.xlane.f32.xlu0 %v121
      %v123 = vpop.xlane.xlu0 %122
      %v124 = vrot.slane %v123, 4
      %v125 = vadd.f32 %v123, %v124
      %v126 = vrot.slane %v125, 2
      %v127 = vadd.f32 %v125, %v126
      %v128 = vrot.slane %v127, 1
      %v129 = vadd.f32 %v127, %v128
      %s130 = vtos %v129
      %v131 = vstv %s130
      %132 = vst [vmem:[#allocation12] sm:$0xff] %v131
    $region25: #{tpu_custom_call.1} parent=1 // pred_fallthru
      _
    // Predicated region
    $region26: #{tpu_custom_call.1} parent=1 // pred_check
      _
    $region27: #{tpu_custom_call.1} parent=1 // pred_check_branch
      %134 = sbr.rel (0) target = $region29
    $region28: #{tpu_custom_call.1} parent=1 // pred_region
      %s136 = ssub.s32 128, 128
      %137 = vsyncadd [#allocation9], %s136
      %s139 = sshll.u32 [#allocation12], 4
      %s140 = int_to_ptr.vmem [resolvable:$true] %s139
      %142 = dma.vmem_to_hbm [thread:$0]  %s140, 128, %s2, [#allocation9]
    $region29: #{tpu_custom_call.1} parent=1 // pred_fallthru
      _
    // Predicated region
    $region30: #{tpu_custom_call.1} parent=1 // pred_check
      _
    $region31: #{tpu_custom_call.1} parent=1 // pred_check_branch
      %144 = sbr.rel (0) target = $region33
    $region32: #{tpu_custom_call.1} parent=1 // pred_region
      %145 = dma.done [#allocation9], 128
    $region33: #{tpu_custom_call.1} parent=1 // pred_fallthru
      _
    %146 = vsyncpa [#allocation8], 1
    %147 = vsyncpa [#allocation11], 1
    %148 = vsyncpa [#allocation9], 1

</llo_original>
